<compile_context>
chip_gen: v7x
topology: tpu7x:2x2x1
jax: 0.10.0
libtpu: 0.0.40
codegen_flags: <defaults>
</compile_context>

<pallas_src>
import functools
import math

import jax
import jax.numpy as jnp
from jax.experimental import pallas as pl
from jax.experimental.pallas import tpu as pltpu


def _build_pe(d_model: int, max_len: int = 5000) -> jnp.ndarray:
    """Deterministic sinusoidal positional-encoding buffer [max_len, 1, d_model]."""
    position = jnp.arange(max_len, dtype=jnp.float32)[:, None]               # [max_len, 1]
    div_term = jnp.exp(
        jnp.arange(0, d_model, 2, dtype=jnp.float32) * (-math.log(10000.0) / d_model)
    )                                                                         # [d_model//2]
    angles = position * div_term                                              # [max_len, d_model//2]
    pe = jnp.zeros((max_len, d_model), dtype=jnp.float32)
    pe = pe.at[:, 0::2].set(jnp.sin(angles))
    pe = pe.at[:, 1::2].set(jnp.cos(angles))
    return pe[:, None, :]                                                     # [max_len, 1, d_model]


# ---------------------------------------------------------------------------
# Kernels
# ---------------------------------------------------------------------------

def _pe_add_3d_kernel(x_ref, pe_ref, o_ref):
    # x_ref / o_ref: [ts, B, D]; pe_ref: [ts, 1, D].
    # D maps to lanes, B to sublanes -> broadcasting pe over B is a cheap
    # sublane broadcast (no tile-sized temporary, no jnp.tile).
    o_ref[...] = x_ref[...] + pe_ref[...]


def _pe_add_flat_kernel(x_ref, pe_ref, o_ref, *, batch: int, d_model: int):
    # x_ref / o_ref: [ts, B*D] lane-dense slab (only used when D % 128 == 0 so
    # every per-batch slab slice is lane-aligned); pe_ref: [ts, D].
    pe_tile = pe_ref[...]
    for b in range(batch):                      # static unrolled loop
        sl = slice(b * d_model, (b + 1) * d_model)
        o_ref[:, sl] = x_ref[:, sl] + pe_tile


# ---------------------------------------------------------------------------
# Tiling heuristics
# ---------------------------------------------------------------------------

def _vmem_capacity_bytes() -> int:
    try:
        info = pltpu.get_tpu_info()
        cap = getattr(info, "vmem_capacity_bytes", None)
        if cap:
            return int(cap)
    except Exception:
        pass
    return 64 * 1024 * 1024  # conservative default (v7x per-TC VMEM)


def _choose_seq_tile(seq: int, row_bytes: int, target_bytes: int, min_tiles: int = 2) -> int:
    """Pick a seq-tile of ~target_bytes, 8-aligned, preferring an even divisor of S,
    and guaranteeing >= min_tiles grid steps when S is long enough to split."""
    ts = max(1, target_bytes // max(row_bytes, 1))
    if min_tiles > 1 and seq >= 8 * min_tiles:
        ts = min(ts, pl.cdiv(seq, min_tiles))   # keep both v7x TCs streaming
    if ts >= seq:
        return seq                              # full-extent block is always legal
    ts = max(8, (ts // 8) * 8)                  # 8-aligned rows (flat-path constraint)
    # Prefer a tile that divides S evenly (no padded/masked tail block), but
    # don't shrink below half the target to find one.
    for cand in range(ts, max(ts // 2, 8) - 1, -8):
        if seq % cand == 0:
            return cand
    return ts


# ---------------------------------------------------------------------------
# Forward
# ---------------------------------------------------------------------------

def positional_encoding_forward(x: jnp.ndarray, pe: jnp.ndarray) -> jnp.ndarray:
    """x: [S, B, D]; pe: [max_len, 1, D]. Returns x + pe[:S] (broadcast over B)."""
    S, B, D = x.shape
    max_len = pe.shape[0]
    assert S <= max_len, f"sequence length {S} exceeds positional buffer max_len {max_len}"

    itemsize = jnp.dtype(x.dtype).itemsize
    # Match dtypes (avoids doubled pe DMA bytes + per-element converts for bf16 x).
    # TODO(synk): cache this slice/cast per (S, dtype) if called repeatedly outside jit.
    pe_s = jax.lax.slice_in_dim(pe, 0, S, axis=0).astype(x.dtype)           # [S, 1, D]

    # Per-generation tile / VMEM tuning.
    vmem_cap = _vmem_capacity_bytes()
    if vmem_cap >= 96 * 1024 * 1024:            # v5e / v6e (128 MiB physical)
        target_tile_bytes = 8 * 1024 * 1024
        vmem_limit = 64 * 1024 * 1024
    else:                                       # v7x (64 MiB physical per TC)
        target_tile_bytes = 4 * 1024 * 1024
        vmem_limit = 32 * 1024 * 1024

    row_bytes = B * D * itemsize
    ts = _choose_seq_tile(S, row_bytes, target_tile_bytes, min_tiles=2)
    grid = (pl.cdiv(S, ts),)

    cost = pl.CostEstimate(
        flops=S * B * D,
        transcendentals=0,
        bytes_accessed=2 * S * B * D * itemsize + S * D * itemsize,
    )
    cparams = pltpu.CompilerParams(
        dimension_semantics=("parallel",),      # tiles independent -> 2-TC sharding on v7x
        vmem_limit_bytes=vmem_limit,
    )

    use_flat = (D % 128 == 0) and (B * D >= 128) and (B > 1)
    if use_flat:
        # Lane-dense [S, B*D] slab; per-batch slices are 128-aligned.
        x2 = x.reshape(S, B * D)
        pe2 = pe_s[:, 0, :]                                                  # [S, D]
        kernel = functools.partial(_pe_add_flat_kernel, batch=B, d_model=D)
        out2 = pl.pallas_call(
            kernel,
            out_shape=jax.ShapeDtypeStruct((S, B * D), x.dtype),
            grid_spec=pl.GridSpec(
                grid=grid,
                in_specs=[
                    pl.BlockSpec((ts, B * D), lambda i: (i, 0)),             # x tile
                    pl.BlockSpec((ts, D), lambda i: (i, 0)),                 # pe tile
                ],
                out_specs=pl.BlockSpec((ts, B * D), lambda i: (i, 0)),
            ),
            compiler_params=cparams,
            cost_estimate=cost,
        )(x2, pe2)
        return out2.reshape(S, B, D)

    # 3-D blocking: D on lanes, B on sublanes; pe broadcast over B inside kernel.
    out = pl.pallas_call(
        _pe_add_3d_kernel,
        out_shape=jax.ShapeDtypeStruct((S, B, D), x.dtype),
        grid_spec=pl.GridSpec(
            grid=grid,
            in_specs=[
                pl.BlockSpec((ts, B, D), lambda i: (i, 0, 0)),               # x tile
                pl.BlockSpec((ts, 1, D), lambda i: (i, 0, 0)),               # pe tile
            ],
            out_specs=pl.BlockSpec((ts, B, D), lambda i: (i, 0, 0)),
        ),
        compiler_params=cparams,
        cost_estimate=cost,
    )(x, pe_s)
    return out


if __name__ == "__main__":
    # --- Primary check: module-consistent small shapes (3-D blocking path) ---
    d_model = 32
    max_len = 64      # small deterministic buffer (same formula as max_len=5000)
    seq = 8
    batch = 2

    pe = _build_pe(d_model, max_len)
    key = jax.random.PRNGKey(0)
    x = jax.random.normal(key, (seq, batch, d_model), dtype=jnp.float32)

    out = jax.block_until_ready(positional_encoding_forward(x, pe))
    ref = x + pe[:seq]
    assert out.shape == (seq, batch, d_model)
    assert jnp.allclose(out, ref, atol=1e-6), "mismatch vs reference (3-D path)"

    # --- Secondary check: lane-aligned shapes exercise the flat (2-D) path ---
    d_model2, seq2, batch2 = 128, 16, 2
    pe_b = _build_pe(d_model2, max_len)
    x_b = jax.random.normal(jax.random.PRNGKey(0), (seq2, batch2, d_model2), dtype=jnp.float32)
    out_b = jax.block_until_ready(positional_encoding_forward(x_b, pe_b))
    ref_b = x_b + pe_b[:seq2]
    assert jnp.allclose(out_b, ref_b, atol=1e-6), "mismatch vs reference (flat path)"

    print("KERNEL_OK")
</pallas_src>

<mosaic_0001>
module attributes {stable_mosaic.version = 11 : i64} {
  func.func @_pe_add_3d_kernel(%arg0: i32, %arg1: memref<8x2x32xf32, #tpu.memory_space<vmem>>, %arg2: memref<8x1x32xf32, #tpu.memory_space<vmem>>, %arg3: memref<8x2x32xf32, #tpu.memory_space<vmem>>) attributes {dimension_semantics = [#tpu.dimension_semantics<parallel>], iteration_bounds = array<i64: 1>, scalar_prefetch = 0 : i64, scratch_operands = 0 : i64, tpu.core_type = #tpu.core_type<tc>, window_params = [{transform_indices = @transform_0, window_bounds = array<i64: 8, 2, 32>}, {transform_indices = @transform_1, window_bounds = array<i64: 8, 1, 32>}, {transform_indices = @transform_2, window_bounds = array<i64: 8, 2, 32>}]} {
    %c0 = arith.constant 0 : index
    %c0_0 = arith.constant 0 : index
    %c0_1 = arith.constant 0 : index
    %0 = vector.load %arg1[%c0, %c0_0, %c0_1] : memref<8x2x32xf32, #tpu.memory_space<vmem>>, vector<8x2x32xf32>
    %c0_2 = arith.constant 0 : index
    %c0_3 = arith.constant 0 : index
    %c0_4 = arith.constant 0 : index
    %1 = vector.load %arg2[%c0_2, %c0_3, %c0_4] : memref<8x1x32xf32, #tpu.memory_space<vmem>>, vector<8x1x32xf32>
    %2 = vector.broadcast %1 : vector<8x1x32xf32> to vector<8x2x32xf32>
    %3 = arith.addf %0, %2 : vector<8x2x32xf32>
    %c0_5 = arith.constant 0 : index
    %c0_6 = arith.constant 0 : index
    %c0_7 = arith.constant 0 : index
    %4 = vector.load %arg3[%c0_5, %c0_6, %c0_7] : memref<8x2x32xf32, #tpu.memory_space<vmem>>, vector<8x2x32xf32>
    tpu.vector_store %arg3[%c0_5, %c0_6, %c0_7], %3 {strides = array<i32>} : memref<8x2x32xf32, #tpu.memory_space<vmem>>, vector<8x2x32xf32>,
    return
  }
  func.func @transform_0(%arg0: i32) -> (i32, i32, i32) {
    %c0_i32 = arith.constant 0 : i32
    %c0_i32_0 = arith.constant 0 : i32
    %c0_i32_1 = arith.constant 0 : i32
    return %arg0, %c0_i32, %c0_i32_0 : i32, i32, i32
  }
  func.func @transform_1(%arg0: i32) -> (i32, i32, i32) {
    %c0_i32 = arith.constant 0 : i32
    %c0_i32_0 = arith.constant 0 : i32
    %c0_i32_1 = arith.constant 0 : i32
    return %arg0, %c0_i32, %c0_i32_0 : i32, i32, i32
  }
  func.func @transform_2(%arg0: i32) -> (i32, i32, i32) {
    %c0_i32 = arith.constant 0 : i32
    %c0_i32_0 = arith.constant 0 : i32
    %c0_i32_1 = arith.constant 0 : i32
    return %arg0, %c0_i32, %c0_i32_0 : i32, i32, i32
  }
}

</mosaic_0001>

<llo_original>
// kernel: tpu_custom_call.1
$region0: #{tpu_custom_call.1}
  #allocation0 [shape = 'u32[]', space=smem, size = 0x4, offset = 0x4, fixed_abs, tag = 'smem constant byte address 0x4 - core index']
  #allocation1 [shape = 'u32[144,128]{1,0:T(1,128)}', space=vmem, size = 0x12000, scoped, tag = 'internal scratch']
  %s0 = inlined_call_operand.hbm [shape: f32[8,2,32], index: 0, kind: input, shape index: {}]
  %s1 = inlined_call_operand.hbm [shape: f32[8,1,32], index: 1, kind: input, shape index: {}]
  %s2 = inlined_call_operand.hbm [shape: f32[8,2,32], index: 2, kind: output, shape index: {}]
  %s3 = sld [smem:[#allocation0]]
  $region26: #{tpu_custom_call.1} parent=0
    _
  %s5 = ssub.s32 1, %s3
  %s6 = scalar_select 0, %s5, %s3
  $region1: #{tpu_custom_call.1} parent=0
    #allocation2 [shape = 'u8[8192]{0}', space=vmem, size = 0x2000, scoped, tag = 'input window, operand 0, single buffered']
    #allocation3 [shape = 's32[1]{0}', space=sflag, size = 0x4, scoped, tag = 'scoped memory for tpu_custom_call.1']
    #allocation4 [shape = 's32[1]{0}', space=sflag, size = 0x4, scoped, tag = 'scoped memory for tpu_custom_call.1']
    #allocation5 [shape = 'u8[4096]{0}', space=vmem, size = 0x1000, scoped, tag = 'input window, operand 1, single buffered']
    #allocation6 [shape = 's32[1]{0}', space=sflag, size = 0x4, scoped, tag = 'scoped memory for tpu_custom_call.1']
    #allocation7 [shape = 'u8[8192]{0}', space=vmem, size = 0x2000, scoped, tag = 'output window, operand 0, single buffered']
    %7 = vsyncpa [#allocation3], 0
    %8 = vsyncpa [#allocation6], 0
    %9 = vsyncpa [#allocation4], 0
    // Predicated region
    $region2: #{tpu_custom_call.1} parent=1 // pred_check
      _
    $region3: #{tpu_custom_call.1} parent=1 // pred_check_branch
      %11 = sbr.rel (0) target = $region5
    $region4: #{tpu_custom_call.1} parent=1 // pred_region
      %s13 = ssub.s32 256, 256
      %14 = vsyncadd [#allocation3], %s13
      %s15 = sshll.u32 [#allocation2], 4
      %s16 = int_to_ptr.vmem [resolvable:$true] %s15
      %21 = dma.hbm_to_vmem [thread:$0]  %s0, 256, %s16, [#allocation3], 32, 32, 2
    $region5: #{tpu_custom_call.1} parent=1 // pred_fallthru
      _
    // Predicated region
    $region6: #{tpu_custom_call.1} parent=1 // pred_check
      _
    $region7: #{tpu_custom_call.1} parent=1 // pred_check_branch
      %23 = sbr.rel (0) target = $region9
    $region8: #{tpu_custom_call.1} parent=1 // pred_region
      %s25 = ssub.s32 128, 128
      %26 = vsyncadd [#allocation6], %s25
      %s27 = sshll.u32 [#allocation5], 4
      %s28 = int_to_ptr.vmem [resolvable:$true] %s27
      %33 = dma.hbm_to_vmem [thread:$0]  %s1, 128, %s28, [#allocation6], 16, 16, 1
    $region9: #{tpu_custom_call.1} parent=1 // pred_fallthru
      _
    // Predicated region
    $region10: #{tpu_custom_call.1} parent=1 // pred_check
      _
    $region11: #{tpu_custom_call.1} parent=1 // pred_check_branch
      %35 = sbr.rel (0) target = $region13
    $region12: #{tpu_custom_call.1} parent=1 // pred_region
      %36 = dma.done [#allocation3], 256
    $region13: #{tpu_custom_call.1} parent=1 // pred_fallthru
      _
    // Predicated region
    $region14: #{tpu_custom_call.1} parent=1 // pred_check
      _
    $region15: #{tpu_custom_call.1} parent=1 // pred_check_branch
      %38 = sbr.rel (0) target = $region17
    $region16: #{tpu_custom_call.1} parent=1 // pred_region
      %39 = dma.done [#allocation6], 128
    $region17: #{tpu_custom_call.1} parent=1 // pred_fallthru
      _
    %v40 = vld [vmem:[#allocation2] sm:$0x3]
    %v41 = vld [vmem:[#allocation2 + $0x2] sm:$0x3]
    %v42 = vld [vmem:[#allocation2 + $0x4] sm:$0x3]
    %v43 = vld [vmem:[#allocation2 + $0x6] sm:$0x3]
    %v44 = vld [vmem:[#allocation2 + $0x8] sm:$0x3]
    %v45 = vld [vmem:[#allocation2 + $0xa] sm:$0x3]
    %v46 = vld [vmem:[#allocation2 + $0xc] sm:$0x3]
    %v47 = vld [vmem:[#allocation2 + $0xe] sm:$0x3]
    %v48 = vld [vmem:[#allocation5] sm:$0x1]
    %v49 = vld [vmem:[#allocation5 + $0x1] sm:$0x1]
    %v50 = vld [vmem:[#allocation5 + $0x2] sm:$0x1]
    %v51 = vld [vmem:[#allocation5 + $0x3] sm:$0x1]
    %v52 = vld [vmem:[#allocation5 + $0x4] sm:$0x1]
    %v53 = vld [vmem:[#allocation5 + $0x5] sm:$0x1]
    %v54 = vld [vmem:[#allocation5 + $0x6] sm:$0x1]
    %v55 = vld [vmem:[#allocation5 + $0x7] sm:$0x1]
    %v64 = vlaneseq
    %v65 = vshrl.u32 %v64, 7
    %v66 = vsub.s32 0, %v65
    %v67 = vrot.slane %v48, %v66
    %v68 = vlaneseq
    %v69 = vshrl.u32 %v68, 7
    %v70 = vsub.s32 0, %v69
    %v71 = vrot.slane %v49, %v70
    %v72 = vlaneseq
    %v73 = vshrl.u32 %v72, 7
    %v74 = vsub.s32 0, %v73
    %v75 = vrot.slane %v50, %v74
    %v76 = vlaneseq
    %v77 = vshrl.u32 %v76, 7
    %v78 = vsub.s32 0, %v77
    %v79 = vrot.slane %v51, %v78
    %v80 = vlaneseq
    %v81 = vshrl.u32 %v80, 7
    %v82 = vsub.s32 0, %v81
    %v83 = vrot.slane %v52, %v82
    %v84 = vlaneseq
    %v85 = vshrl.u32 %v84, 7
    %v86 = vsub.s32 0, %v85
    %v87 = vrot.slane %v53, %v86
    %v88 = vlaneseq
    %v89 = vshrl.u32 %v88, 7
    %v90 = vsub.s32 0, %v89
    %v91 = vrot.slane %v54, %v90
    %v92 = vlaneseq
    %v93 = vshrl.u32 %v92, 7
    %v94 = vsub.s32 0, %v93
    %v95 = vrot.slane %v55, %v94
    %v104 = vadd.f32 %v40, %v67
    %v105 = vadd.f32 %v41, %v71
    %v106 = vadd.f32 %v42, %v75
    %v107 = vadd.f32 %v43, %v79
    %v108 = vadd.f32 %v44, %v83
    %v109 = vadd.f32 %v45, %v87
    %v110 = vadd.f32 %v46, %v91
    %v111 = vadd.f32 %v47, %v95
    %vm112 = vcmask 254976
    %113 = vst.msk [vmem:[#allocation7] sm:$0x3] %vm112, %v104
    %114 = vst.msk [vmem:[#allocation7 + $0x2] sm:$0x3] %vm112, %v105
    %115 = vst.msk [vmem:[#allocation7 + $0x4] sm:$0x3] %vm112, %v106
    %116 = vst.msk [vmem:[#allocation7 + $0x6] sm:$0x3] %vm112, %v107
    %117 = vst.msk [vmem:[#allocation7 + $0x8] sm:$0x3] %vm112, %v108
    %118 = vst.msk [vmem:[#allocation7 + $0xa] sm:$0x3] %vm112, %v109
    %119 = vst.msk [vmem:[#allocation7 + $0xc] sm:$0x3] %vm112, %v110
    %120 = vst.msk [vmem:[#allocation7 + $0xe] sm:$0x3] %vm112, %v111
    // Predicated region
    $region18: #{tpu_custom_call.1} parent=1 // pred_check
      _
    $region19: #{tpu_custom_call.1} parent=1 // pred_check_branch
      %122 = sbr.rel (0) target = $region21
    $region20: #{tpu_custom_call.1} parent=1 // pred_region
      %s124 = ssub.s32 256, 256
      %125 = vsyncadd [#allocation4], %s124
      %s126 = sshll.u32 [#allocation7], 4
      %s127 = int_to_ptr.vmem [resolvable:$true] %s126
      %132 = dma.vmem_to_hbm [thread:$0]  %s127, 256, %s2, [#allocation4], 32, 32, 2
    $region21: #{tpu_custom_call.1} parent=1 // pred_fallthru
      _
    // Predicated region
    $region22: #{tpu_custom_call.1} parent=1 // pred_check
      _
    $region23: #{tpu_custom_call.1} parent=1 // pred_check_branch
      %134 = sbr.rel (0) target = $region25
    $region24: #{tpu_custom_call.1} parent=1 // pred_region
      %135 = dma.done [#allocation4], 256
    $region25: #{tpu_custom_call.1} parent=1 // pred_fallthru
      _
    %136 = vsyncpa [#allocation3], 1
    %137 = vsyncpa [#allocation6], 1
    %138 = vsyncpa [#allocation4], 1

</llo_original>
